<compile_context>
chip_gen: v5e
topology: v5e:2x2
jax: 0.10.0
libtpu: 0.0.40
codegen_flags: <defaults>
</compile_context>

<pallas_src>
import math

import numpy as np

import jax
import jax.numpy as jnp
from jax import lax
from jax.experimental import pallas as pl
from jax.experimental.pallas import tpu as pltpu

# Module hyperparameters (defaults of TransformerDecoderLayer)
D_MODEL = 4                                # attention sequence length == input batch
DIM_EMB_CHOICE = 10
DIM_EMB_VAL = 4
DIM_EMB = DIM_EMB_CHOICE + DIM_EMB_VAL     # 14
DIM_FF = 2
FF_HIDDEN = DIM_FF * 4                     # 8
NPOS = 4                                   # 4 token positions (PyTorch dim 1)
OUT_DIM = 4
NUM_CHOICE = 4                             # choice_emb rows
NUM_VAL = 100                              # val_emb rows

# ---------------------------------------------------------------------------
# Packed parameter slab layout.  One f32 [SLAB_ROWS, SLAB_COLS] array; every block
# starts on an 8-row (sublane) boundary; biases / folded biases are stored as the row
# directly under the corresponding weight block (picked up by the ones-column of the
# augmented activation).  Unused entries are zero (required for the one-hot embedding
# matmul and harmless elsewhere).
# ---------------------------------------------------------------------------
SLAB_COLS = 48
ROW_CHOICE = 0       # rows 0..3     : choice_emb [4,10]   at cols 0:10
ROW_VAL = 8          # rows 8..107   : val_emb    [100,4]  at cols 10:14
ROW_POS = 112        # row 112       : pos_emb[NPOS-1] at cols 0:14, 1.0 at col 14
EMB_ROWS = 120       # rows 0..119   : fused embedding/one-hot block
ROW_QKV = 120        # rows 120..133 : Wq/sqrt(E) | Wk | Wv at cols 0/16/32; row 134 biases
ROW_W13X = 136       # rows 136..149 : W1 at cols 0:8, W3 at cols 16:20; row 150 = c1 | c3
ROW_W13A = 152       # rows 152..165 : Wo@W1 at cols 0:8, Wo@W3 at cols 16:20
ROW_W23 = 168        # rows 168..175 : W2@W3 at cols 0:4
SLAB_ROWS = 176


def pack_params(p):
    """One-time host-side packing (and algebraic folding) of all parameters."""
    scale = 1.0 / math.sqrt(DIM_EMB)
    slab = np.zeros((SLAB_ROWS, SLAB_COLS), np.float32)

    choice_emb = np.asarray(p["choice_emb"], np.float32)
    val_emb = np.asarray(p["val_emb"], np.float32)
    pos_emb = np.asarray(p["pos_emb"], np.float32)
    wq, bq = np.asarray(p["wq"], np.float32), np.asarray(p["bq"], np.float32)
    wk, bk = np.asarray(p["wk"], np.float32), np.asarray(p["bk"], np.float32)
    wv, bv = np.asarray(p["wv"], np.float32), np.asarray(p["bv"], np.float32)
    wo, bo = np.asarray(p["wo"], np.float32), np.asarray(p["bo"], np.float32)
    w1, b1 = np.asarray(p["w1"], np.float32), np.asarray(p["b1"], np.float32)
    w2, b2 = np.asarray(p["w2"], np.float32), np.asarray(p["b2"], np.float32)
    w3, b3 = np.asarray(p["w3"], np.float32), np.asarray(p["b3"], np.float32)

    # Fused embedding block.  choice fills cols 0:10, val fills cols 10:14, the pos row
    # carries a 1.0 at col 14 so the embedding matmul also yields the ones-column used
    # to fold every subsequent bias into its weight matrix.
    slab[ROW_CHOICE:ROW_CHOICE + NUM_CHOICE, 0:DIM_EMB_CHOICE] = choice_emb
    slab[ROW_VAL:ROW_VAL + NUM_VAL, DIM_EMB_CHOICE:DIM_EMB] = val_emb
    slab[ROW_POS, 0:DIM_EMB] = pos_emb[-1]
    slab[ROW_POS, DIM_EMB] = 1.0

    # Fused QKV projection.  1/sqrt(E) attention scale folded into Wq/bq; biases as the
    # extra (15th) row, consumed via the ones-column of the augmented activation.
    slab[ROW_QKV:ROW_QKV + DIM_EMB, 0:DIM_EMB] = wq * scale
    slab[ROW_QKV:ROW_QKV + DIM_EMB, 16:16 + DIM_EMB] = wk
    slab[ROW_QKV:ROW_QKV + DIM_EMB, 32:32 + DIM_EMB] = wv
    slab[ROW_QKV + DIM_EMB, 0:DIM_EMB] = bq[0] * scale
    slab[ROW_QKV + DIM_EMB, 16:16 + DIM_EMB] = bk[0]
    slab[ROW_QKV + DIM_EMB, 32:32 + DIM_EMB] = bv[0]

    # Algebraically folded tail:
    #   h   = relu(x@W1 + attn@(Wo@W1) + c1),   c1 = bo@W1 + b1
    #   out = x@W3 + attn@(Wo@W3) + c3 + h@(W2@W3),   c3 = bo@W3 + b2@W3 + b3
    c1 = (bo @ w1 + b1)[0]
    c3 = (bo @ w3 + b2 @ w3 + b3)[0]
    slab[ROW_W13X:ROW_W13X + DIM_EMB, 0:FF_HIDDEN] = w1
    slab[ROW_W13X + DIM_EMB, 0:FF_HIDDEN] = c1
    slab[ROW_W13X:ROW_W13X + DIM_EMB, 16:16 + OUT_DIM] = w3
    slab[ROW_W13X + DIM_EMB, 16:16 + OUT_DIM] = c3
    slab[ROW_W13A:ROW_W13A + DIM_EMB, 0:FF_HIDDEN] = wo @ w1
    slab[ROW_W13A:ROW_W13A + DIM_EMB, 16:16 + OUT_DIM] = wo @ w3
    slab[ROW_W23:ROW_W23 + FF_HIDDEN, 0:OUT_DIM] = w2 @ w3

    return jnp.asarray(slab)


def _decoder_last_pos_kernel(idx_ref, slab_ref, out_ref):
    """Single-invocation kernel: full decoder layer for the last token position only.

    idx_ref : [L, 2*NPOS] int32  (flattened indices; cols 6/7 = choice/val of position 3)
    slab_ref: [SLAB_ROWS, SLAB_COLS] f32 packed/folded parameters
    out_ref : [L, OUT_DIM] f32
    """
    L = idx_ref.shape[0]            # == d_model == 4 (the attention sequence axis)
    E = DIM_EMB
    EA = E + 1                      # augmented width (ones-column at col 14)

    # ---- fused embedding lookup: ONE one-hot matmul against the packed block ----
    ci = idx_ref[:, 2 * (NPOS - 1):2 * (NPOS - 1) + 1]        # [L,1] choice index (0..3)
    vi = idx_ref[:, 2 * (NPOS - 1) + 1:2 * (NPOS - 1) + 2]    # [L,1] value index (0..99)
    lane = lax.broadcasted_iota(jnp.int32, (L, EMB_ROWS), 1)
    sel = jnp.logical_or(jnp.logical_or(lane == ci, lane == vi + ROW_VAL),
                         lane == ROW_POS).astype(jnp.float32)            # [L, 120]
    emb_tab = slab_ref[0:EMB_ROWS, 0:EA]                                  # [120, 15]
    # x_aug = [choice||val + pos_emb[-1] | 1.0]  -> the ones-column folds all biases.
    x_aug = jnp.dot(sel, emb_tab, preferred_element_type=jnp.float32)     # [L, 15]

    # ---- self-attention (1 head, causal over L), fused QKV projection + biases ----
    wqkv = slab_ref[ROW_QKV:ROW_QKV + EA, :]                              # [15, 48]
    qkv = jnp.dot(x_aug, wqkv, preferred_element_type=jnp.float32)        # [L, 48]
    q = qkv[:, 0:E]              # already scaled by 1/sqrt(E) via the packed weights
    k = qkv[:, 16:16 + E]
    v = qkv[:, 32:32 + E]

    # scores[l, m] = q_l . k_m ; contract last dims (no explicit transpose)
    s = lax.dot_general(q, k, (((1,), (1,)), ((), ())),
                        preferred_element_type=jnp.float32)               # [L, L]

    # causal mask: large finite negative (NaN-safe) where source index > target index.
    # Safe because the diagonal is never masked, so the row max is always unmasked and
    # the masked entries underflow to exactly 0 after max-subtraction + exp.
    row = lax.broadcasted_iota(jnp.int32, (L, L), 0)
    col = lax.broadcasted_iota(jnp.int32, (L, L), 1)
    s = jnp.where(col > row, -1e30, s)

    # softmax with DEFERRED normalization: normalize after the p@v matmul so the exact
    # division overlaps with MXU latency instead of sitting on the serial chain.
    s = s - jnp.max(s, axis=-1, keepdims=True)
    p = jnp.exp(s)
    attn_un = jnp.dot(p, v, preferred_element_type=jnp.float32)           # [L, 14]
    denom = jnp.sum(p, axis=-1, keepdims=True)                            # [L, 1]
    attn = attn_un / denom                                                # exact

    # ---- algebraically folded residual + FF + output head ----
    # part = [ x@W1 + c1 | . | x@W3 + c3 ]  +  [ attn@(Wo@W1) | . | attn@(Wo@W3) ]
    w13x = slab_ref[ROW_W13X:ROW_W13X + EA, 0:32]                         # [15, 32]
    w13a = slab_ref[ROW_W13A:ROW_W13A + E, 0:32]                          # [14, 32]
    part = (jnp.dot(x_aug, w13x, preferred_element_type=jnp.float32)
            + jnp.dot(attn, w13a, preferred_element_type=jnp.float32))    # [L, 32]
    h = jnp.maximum(part[:, 0:FF_HIDDEN], 0.0)                            # relu branch
    out_partial = part[:, 16:16 + OUT_DIM]

    w23 = slab_ref[ROW_W23:ROW_W23 + FF_HIDDEN, 0:OUT_DIM]                # [8, 4]
    out_ref[...] = out_partial + jnp.dot(h, w23, preferred_element_type=jnp.float32)


@jax.jit
def forward(x_idx, packed_params):
    """x_idx: int32 [B, 4, 2] with B == d_model == 4; returns ([B, 4] float32, None)."""
    B = x_idx.shape[0]
    # The 4x4 causal mask is applied over the PyTorch batch axis (batch_first=False),
    # so the module only makes sense for B == d_model.  Fail loudly otherwise.
    assert B == D_MODEL, f"batch size {B} must equal d_model={D_MODEL}"
    idx_flat = x_idx.reshape(B, NPOS * 2).astype(jnp.int32)   # contiguous reshape

    out = pl.pallas_call(
        _decoder_last_pos_kernel,
        out_shape=jax.ShapeDtypeStruct((B, OUT_DIM), jnp.float32),
        in_specs=[pl.BlockSpec(memory_space=pltpu.MemorySpace.VMEM),
                  pl.BlockSpec(memory_space=pltpu.MemorySpace.VMEM)],
        out_specs=pl.BlockSpec(memory_space=pltpu.MemorySpace.VMEM),
        # Tiny custom call: tell XLA it is cheap so it schedules around it.
        cost_estimate=pl.CostEstimate(flops=30_000, transcendentals=16,
                                      bytes_accessed=SLAB_ROWS * SLAB_COLS * 4 + 256),
    )(idx_flat, packed_params)
    return out, None


def forward_reference(x_idx, p):
    """Pure-JAX reference mirroring the full PyTorch forward (for validation)."""
    choice = p["choice_emb"][x_idx[:, :, 0]]
    val = p["val_emb"][x_idx[:, :, -1]]
    x = jnp.concatenate([choice, val], axis=2)                         # [B, 4, 14]
    x = x + p["pos_emb"][None, :, :]

    q = x @ p["wq"] + p["bq"]
    k = x @ p["wk"] + p["bk"]
    v = x @ p["wv"] + p["bv"]
    scale = 1.0 / math.sqrt(DIM_EMB)
    s = jnp.einsum("lne,mne->nlm", q, k) * scale                       # [4, B, B]
    L = x.shape[0]
    mask = jnp.where(jnp.triu(jnp.ones((L, L), bool), k=1), -jnp.inf, 0.0)
    a = jax.nn.softmax(s + mask[None], axis=-1)
    attn = jnp.einsum("nlm,mne->lne", a, v)                            # [B, 4, 14]
    x = x + (attn @ p["wo"] + p["bo"])
    h = jax.nn.relu(x @ p["w1"] + p["b1"])
    x = x + (h @ p["w2"] + p["b2"])
    out = (x @ p["w3"] + p["b3"])[:, -1, :]
    return out, None


if __name__ == "__main__":
    key = jax.random.PRNGKey(0)
    ks = jax.random.split(key, 20)

    def xavier(k, shape):
        fan_in, fan_out = shape
        lim = math.sqrt(6.0 / (fan_in + fan_out))
        return jax.random.uniform(k, shape, jnp.float32, -lim, lim)

    def small(k, shape):
        return jax.random.uniform(k, shape, jnp.float32, -0.1, 0.1)

    # Weights stored as (in_dim, out_dim), i.e. already-transposed PyTorch Linear weights.
    params = {
        "pos_emb": jax.random.normal(ks[0], (NPOS, DIM_EMB), jnp.float32),
        "choice_emb": jax.random.normal(ks[1], (NUM_CHOICE, DIM_EMB_CHOICE), jnp.float32),
        "val_emb": jax.random.normal(ks[2], (NUM_VAL, DIM_EMB_VAL), jnp.float32),
        "wq": xavier(ks[3], (DIM_EMB, DIM_EMB)), "bq": small(ks[4], (1, DIM_EMB)),
        "wk": xavier(ks[5], (DIM_EMB, DIM_EMB)), "bk": small(ks[6], (1, DIM_EMB)),
        "wv": xavier(ks[7], (DIM_EMB, DIM_EMB)), "bv": small(ks[8], (1, DIM_EMB)),
        "wo": xavier(ks[9], (DIM_EMB, DIM_EMB)), "bo": small(ks[10], (1, DIM_EMB)),
        "w1": xavier(ks[11], (DIM_EMB, FF_HIDDEN)), "b1": small(ks[12], (1, FF_HIDDEN)),
        "w2": xavier(ks[13], (FF_HIDDEN, DIM_EMB)), "b2": small(ks[14], (1, DIM_EMB)),
        "w3": xavier(ks[15], (DIM_EMB, OUT_DIM)), "b3": small(ks[16], (1, OUT_DIM)),
    }
    packed = pack_params(params)    # one-time parameter packing / folding (single slab)

    # Input: int indices [B, 4, 2]; B must equal d_model=4 (4x4 causal mask over the
    # batch axis, which is the MHA sequence axis since batch_first=False).
    B = D_MODEL
    choice_idx = jax.random.randint(ks[17], (B, NPOS, 1), 0, NUM_CHOICE)
    val_idx = jax.random.randint(ks[18], (B, NPOS, 1), 0, NUM_VAL)
    x_idx = jnp.concatenate([choice_idx, val_idx], axis=2).astype(jnp.int32)   # [4, 4, 2]

    out, loss = forward(x_idx, packed)
    out = jax.block_until_ready(out)

    ref, _ = forward_reference(x_idx, params)
    assert out.shape == (B, OUT_DIM), out.shape
    assert loss is None
    # Exact softmax normalization (division deferred past p@v) -> only reassociation /
    # weight-folding error remains (~1e-5); 5e-4 is a comfortable but meaningful bound.
    assert jnp.allclose(out, ref, atol=5e-4, rtol=5e-4), (out, ref)

    print("KERNEL_OK")
</pallas_src>

<mosaic_0001>
module attributes {stable_mosaic.version = 11 : i64} {
  func.func @_decoder_last_pos_kernel(%arg0: memref<4x8xi32, #tpu.memory_space<vmem>>, %arg1: memref<176x48xf32, #tpu.memory_space<vmem>>, %arg2: memref<4x4xf32, #tpu.memory_space<vmem>>) attributes {dimension_semantics = [], scalar_prefetch = 0 : i64, scratch_operands = 0 : i64, tpu.core_type = #tpu.core_type<tc>} {
    %c0 = arith.constant 0 : index
    %c6 = arith.constant 6 : index
    %0 = vector.load %arg0[%c0, %c6] : memref<4x8xi32, #tpu.memory_space<vmem>>, vector<4x1xi32>
    %c0_0 = arith.constant 0 : index
    %c7 = arith.constant 7 : index
    %1 = vector.load %arg0[%c0_0, %c7] : memref<4x8xi32, #tpu.memory_space<vmem>>, vector<4x1xi32>
    %2 = tpu.iota {dimensions = array<i32: 1>} : vector<4x120xi32>
    %3 = vector.broadcast %0 : vector<4x1xi32> to vector<4x120xi32>
    %4 = arith.cmpi eq, %2, %3 : vector<4x120xi32>
    %c8_i32 = arith.constant 8 : i32
    %5 = vector.broadcast %c8_i32 : i32 to vector<4x1xi32>
    %6 = arith.addi %1, %5 : vector<4x1xi32>
    %7 = vector.broadcast %6 : vector<4x1xi32> to vector<4x120xi32>
    %8 = arith.cmpi eq, %2, %7 : vector<4x120xi32>
    %9 = arith.ori %4, %8 : vector<4x120xi1>
    %c112_i32 = arith.constant 112 : i32
    %10 = vector.broadcast %c112_i32 : i32 to vector<4x120xi32>
    %11 = arith.cmpi eq, %2, %10 : vector<4x120xi32>
    %12 = arith.ori %9, %11 : vector<4x120xi1>
    %13 = arith.extui %12 : vector<4x120xi1> to vector<4x120xi32>
    %14 = arith.sitofp %13 : vector<4x120xi32> to vector<4x120xf32>
    %c0_1 = arith.constant 0 : index
    %c0_2 = arith.constant 0 : index
    %15 = vector.load %arg1[%c0_1, %c0_2] : memref<176x48xf32, #tpu.memory_space<vmem>>, vector<120x15xf32>
    %cst = arith.constant dense<0.000000e+00> : vector<4x15xf32>
    %16 = tpu.matmul %14, %15, %cst {dimension_numbers = #tpu.dot_dimension_numbers<[1], [0], [0], [1], [0, 0, 1, 1], [], []>} : vector<4x120xf32>, vector<120x15xf32>, vector<4x15xf32> -> vector<4x15xf32>
    %c120 = arith.constant 120 : index
    %c0_3 = arith.constant 0 : index
    %17 = vector.load %arg1[%c120, %c0_3] : memref<176x48xf32, #tpu.memory_space<vmem>>, vector<15x48xf32>
    %cst_4 = arith.constant dense<0.000000e+00> : vector<4x48xf32>
    %18 = tpu.matmul %16, %17, %cst_4 {dimension_numbers = #tpu.dot_dimension_numbers<[1], [0], [0], [1], [0, 0, 1, 1], [], []>} : vector<4x15xf32>, vector<15x48xf32>, vector<4x48xf32> -> vector<4x48xf32>
    %19 = vector.extract_strided_slice %18 {offsets = [0, 0], sizes = [4, 14], strides = [1, 1]} : vector<4x48xf32> to vector<4x14xf32>
    %20 = vector.extract_strided_slice %18 {offsets = [0, 16], sizes = [4, 14], strides = [1, 1]} : vector<4x48xf32> to vector<4x14xf32>
    %21 = vector.extract_strided_slice %18 {offsets = [0, 32], sizes = [4, 14], strides = [1, 1]} : vector<4x48xf32> to vector<4x14xf32>
    %cst_5 = arith.constant dense<0.000000e+00> : vector<4x4xf32>
    %22 = tpu.matmul %19, %20, %cst_5 {dimension_numbers = #tpu.dot_dimension_numbers<[1], [1], [0], [0], [0, 0, 1, 0], [], []>} : vector<4x14xf32>, vector<4x14xf32>, vector<4x4xf32> -> vector<4x4xf32>
    %23 = tpu.iota {dimensions = array<i32: 0>} : vector<4x4xi32>
    %24 = tpu.iota {dimensions = array<i32: 1>} : vector<4x4xi32>
    %25 = arith.cmpi sgt, %24, %23 : vector<4x4xi32>
    %cst_6 = arith.constant -1.000000e+30 : f32
    %26 = vector.broadcast %cst_6 : f32 to vector<4x4xf32>
    %27 = arith.select %25, %26, %22 : vector<4x4xi1>, vector<4x4xf32>
    %cst_7 = arith.constant dense<0xFF800000> : vector<4xf32>
    %28 = vector.multi_reduction <maximumf>, %27, %cst_7 [1] : vector<4x4xf32> to vector<4xf32>
    %29 = vector.shape_cast %28 : vector<4xf32> to vector<4x1xf32>
    %30 = vector.broadcast %29 : vector<4x1xf32> to vector<4x4xf32>
    %31 = arith.subf %27, %30 : vector<4x4xf32>
    %32 = math.exp %31 : vector<4x4xf32>
    %cst_8 = arith.constant dense<0.000000e+00> : vector<4x14xf32>
    %33 = tpu.matmul %32, %21, %cst_8 {dimension_numbers = #tpu.dot_dimension_numbers<[1], [0], [0], [1], [0, 0, 1, 1], [], []>} : vector<4x4xf32>, vector<4x14xf32>, vector<4x14xf32> -> vector<4x14xf32>
    %cst_9 = arith.constant dense<0.000000e+00> : vector<4xf32>
    %34 = vector.multi_reduction <add>, %32, %cst_9 [1] : vector<4x4xf32> to vector<4xf32>
    %35 = vector.shape_cast %34 : vector<4xf32> to vector<4x1xf32>
    %36 = vector.broadcast %35 : vector<4x1xf32> to vector<4x14xf32>
    %37 = arith.divf %33, %36 : vector<4x14xf32>
    %c136 = arith.constant 136 : index
    %c0_10 = arith.constant 0 : index
    %38 = vector.load %arg1[%c136, %c0_10] : memref<176x48xf32, #tpu.memory_space<vmem>>, vector<15x32xf32>
    %c152 = arith.constant 152 : index
    %c0_11 = arith.constant 0 : index
    %39 = vector.load %arg1[%c152, %c0_11] : memref<176x48xf32, #tpu.memory_space<vmem>>, vector<14x32xf32>
    %cst_12 = arith.constant dense<0.000000e+00> : vector<4x32xf32>
    %40 = tpu.matmul %16, %38, %cst_12 {dimension_numbers = #tpu.dot_dimension_numbers<[1], [0], [0], [1], [0, 0, 1, 1], [], []>} : vector<4x15xf32>, vector<15x32xf32>, vector<4x32xf32> -> vector<4x32xf32>
    %cst_13 = arith.constant dense<0.000000e+00> : vector<4x32xf32>
    %41 = tpu.matmul %37, %39, %cst_13 {dimension_numbers = #tpu.dot_dimension_numbers<[1], [0], [0], [1], [0, 0, 1, 1], [], []>} : vector<4x14xf32>, vector<14x32xf32>, vector<4x32xf32> -> vector<4x32xf32>
    %42 = arith.addf %40, %41 : vector<4x32xf32>
    %43 = vector.extract_strided_slice %42 {offsets = [0, 0], sizes = [4, 8], strides = [1, 1]} : vector<4x32xf32> to vector<4x8xf32>
    %cst_14 = arith.constant 0.000000e+00 : f32
    %44 = vector.broadcast %cst_14 : f32 to vector<4x8xf32>
    %45 = arith.maximumf %43, %44 : vector<4x8xf32>
    %46 = vector.extract_strided_slice %42 {offsets = [0, 16], sizes = [4, 4], strides = [1, 1]} : vector<4x32xf32> to vector<4x4xf32>
    %c168 = arith.constant 168 : index
    %c0_15 = arith.constant 0 : index
    %47 = vector.load %arg1[%c168, %c0_15] : memref<176x48xf32, #tpu.memory_space<vmem>>, vector<8x4xf32>
    %cst_16 = arith.constant dense<0.000000e+00> : vector<4x4xf32>
    %48 = tpu.matmul %45, %47, %cst_16 {dimension_numbers = #tpu.dot_dimension_numbers<[1], [0], [0], [1], [0, 0, 1, 1], [], []>} : vector<4x8xf32>, vector<8x4xf32>, vector<4x4xf32> -> vector<4x4xf32>
    %49 = arith.addf %46, %48 : vector<4x4xf32>
    %c0_17 = arith.constant 0 : index
    %c0_18 = arith.constant 0 : index
    %50 = vector.load %arg2[%c0_17, %c0_18] : memref<4x4xf32, #tpu.memory_space<vmem>>, vector<4x4xf32>
    tpu.vector_store %arg2[%c0_17, %c0_18], %49 {strides = array<i32>} : memref<4x4xf32, #tpu.memory_space<vmem>>, vector<4x4xf32>,
    return
  }
}

</mosaic_0001>

<llo_original>
// kernel: forward.1
$region0: #{forward.1}
  #allocation0 [shape = 'u32[]', space=smem, size = 0x4, offset = 0x4, fixed_abs, tag = 'smem constant byte address 0x4 - core index']
  #allocation1 [shape = 'u32[72,128]{1,0:T(1,128)}', space=vmem, size = 0x9000, scoped, tag = 'internal scratch']
  %s0 = inlined_call_operand.vmem [shape: s32[4,8], index: 0, kind: input, shape index: {}]
  %s1 = inlined_call_operand.vmem [shape: f32[176,48], index: 1, kind: input, shape index: {}]
  %s2 = inlined_call_operand.hbm [shape: f32[4,4], index: 2, kind: output, shape index: {}]
  %s3 = sld [smem:[#allocation0]]
  $region18: #{forward.1} parent=0
    _
  %s5 = ssub.s32 1, %s3
  %s6 = scalar_select 0, %s5, %s3
  $region1: #{forward.1} parent=0
    #allocation2 [shape = 'u8[2048]{0}', space=vmem, size = 0x800, scoped, tag = 'output window, operand 0, single buffered']
    #allocation3 [shape = 's32[1]{0}', space=sflag, size = 0x4, scoped, tag = 'scoped memory for forward.1']
    %7 = vsyncpa [#allocation3], 0
    // Predicated region
    $region2: #{forward.1} parent=1 // pred_check
      _
    $region3: #{forward.1} parent=1 // pred_check_branch
      %9 = sbr.rel (0) target = $region5
    $region4: #{forward.1} parent=1 // pred_region
      _
    $region5: #{forward.1} parent=1 // pred_fallthru
      _
    // Predicated region
    $region6: #{forward.1} parent=1 // pred_check
      _
    $region7: #{forward.1} parent=1 // pred_check_branch
      %11 = sbr.rel (0) target = $region9
    $region8: #{forward.1} parent=1 // pred_region
      _
    $region9: #{forward.1} parent=1 // pred_fallthru
      _
    %v12 = vld [vmem:[%s0] sm:$0xf]
    %v13 = vlaneseq
    %v14 = vand.u32 %v13, 127
    %15 = vset.pattern.permute.xlu0 6
    %16 = vperm.xlu0 %15, %v12
    %v17 = vpop.permute.xlu0 %16
    %vm18 = vcmp.eq.s32.totalorder %v14, %v17
    %v19 = vadd.s32 %v12, 8
    %20 = vset.pattern.permute.xlu0 7
    %21 = vperm.xlu0 %20, %v19
    %v22 = vpop.permute.xlu0 %21
    %vm23 = vcmp.eq.s32.totalorder %v14, %v22
    %vm24 = vmor %vm18, %vm23
    %vm25 = vcmp.eq.s32.totalorder %v14, 112
    %vm26 = vmor %vm24, %vm25
    %v27 = vsel %vm26, 1, 0
    %v28 = vcvt.s32.f32 %v27
    %v29 = vld [vmem:[%s1] sm:$0xff]
    %v30 = vld [vmem:[%s1 + $0x8] sm:$0xff]
    %v31 = vld [vmem:[%s1 + $0x10] sm:$0xff]
    %v32 = vld [vmem:[%s1 + $0x18] sm:$0xff]
    %v33 = vld [vmem:[%s1 + $0x20] sm:$0xff]
    %v34 = vld [vmem:[%s1 + $0x28] sm:$0xff]
    %v35 = vld [vmem:[%s1 + $0x30] sm:$0xff]
    %v36 = vld [vmem:[%s1 + $0x38] sm:$0xff]
    %v37 = vld [vmem:[%s1 + $0x40] sm:$0xff]
    %v38 = vld [vmem:[%s1 + $0x48] sm:$0xff]
    %v39 = vld [vmem:[%s1 + $0x50] sm:$0xff]
    %v40 = vld [vmem:[%s1 + $0x58] sm:$0xff]
    %v41 = vld [vmem:[%s1 + $0x60] sm:$0xff]
    %v42 = vld [vmem:[%s1 + $0x68] sm:$0xff]
    %v43 = vld [vmem:[%s1 + $0x70] sm:$0xff]
    %vm44 = vcmask 982016
    %v46 = vsel %vm44, %v28, 0
    %48 = vmatpush.msra.mxu0 0.0
    %49 = vmatpush.msra.mxu0 %v43
    %50 = vmatpush.msra.mxu0 %v42
    %51 = vmatpush.msra.mxu0 %v41
    %52 = vmatpush.msra.mxu0 %v40
    %53 = vmatpush.msra.mxu0 %v39
    %54 = vmatpush.msra.mxu0 %v38
    %55 = vmatpush.msra.mxu0 %v37
    %56 = vmatpush.msra.mxu0 %v36
    %57 = vmatpush.msra.mxu0 %v35
    %58 = vmatpush.msra.mxu0 %v34
    %59 = vmatpush.msra.mxu0 %v33
    %60 = vmatpush.msra.mxu0 %v32
    %61 = vmatpush.msra.mxu0 %v31
    %62 = vmatpush.msra.mxu0 %v30
    %63 = vmatpush.msra.mxu0 %v29
    %64 = vmatmul.f32.gmra.mxu0 %v46
    %v65 = vpop.f32.mrf.mxu0
    %v66 = vadd.f32 0.0, %v65
    %67 = vdwg.mxu0
    %v68 = vld [vmem:[%s1 + $0x78] sm:$0xff]
    %v69 = vld [vmem:[%s1 + $0x80] sm:$0x7f]
    %vm70 = vcmask 121856
    %v72 = vsel %vm70, %v66, 0
    %vm74 = vcmask 1046528
    %v76 = vsel %vm74, %v69, 0
    %78 = vmatpush.msra.mxu0 0.0
    %79 = vmatpush.msra.mxu0 0.0
    %80 = vmatpush.msra.mxu0 0.0
    %81 = vmatpush.msra.mxu0 0.0
    %82 = vmatpush.msra.mxu0 0.0
    %83 = vmatpush.msra.mxu0 0.0
    %84 = vmatpush.msra.mxu0 0.0
    %85 = vmatpush.msra.mxu0 0.0
    %86 = vmatpush.msra.mxu0 0.0
    %87 = vmatpush.msra.mxu0 0.0
    %88 = vmatpush.msra.mxu0 0.0
    %89 = vmatpush.msra.mxu0 0.0
    %90 = vmatpush.msra.mxu0 0.0
    %91 = vmatpush.msra.mxu0 0.0
    %92 = vmatpush.msra.mxu0 %v76
    %93 = vmatpush.msra.mxu0 %v68
    %94 = vmatmul.f32.gmra.mxu0 %v72
    %v95 = vpop.f32.mrf.mxu0
    %v96 = vadd.f32 0.0, %v95
    %97 = vdwg.mxu0
    %99 = vrot.lane.b32.xlu0 %v96, 112
    %v100 = vpop.permute.xlu0 %99
    %vm101 = vcmask 113664
    %v102 = vsel %vm101, %v96, 0
    %v104 = vsel %vm101, %v100, 0
    %106 = vmatpush.xpose.msra.mxu0 0.0
    %107 = vmatpush.xpose.msra.mxu0 0.0
    %108 = vmatpush.xpose.msra.mxu0 0.0
    %109 = vmatpush.xpose.msra.mxu0 0.0
    %110 = vmatpush.xpose.msra.mxu0 0.0
    %111 = vmatpush.xpose.msra.mxu0 0.0
    %112 = vmatpush.xpose.msra.mxu0 0.0
    %113 = vmatpush.xpose.msra.mxu0 0.0
    %114 = vmatpush.xpose.msra.mxu0 0.0
    %115 = vmatpush.xpose.msra.mxu0 0.0
    %116 = vmatpush.xpose.msra.mxu0 0.0
    %117 = vmatpush.xpose.msra.mxu0 0.0
    %118 = vmatpush.xpose.msra.mxu0 0.0
    %119 = vmatpush.xpose.msra.mxu0 0.0
    %120 = vmatpush.xpose.msra.mxu0 0.0
    %121 = vmatpush.xpose.msra.mxu0 %v104
    %122 = vmatmul.f32.gmra.mxu0 %v102
    %v123 = vpop.f32.mrf.mxu0
    %v124 = vadd.f32 0.0, %v123
    %125 = vdwg.mxu0
    %v126 = vlaneseq
    %v127 = vshrl.u32 %v126, 7
    %vm128 = vcmp.gt.s32.totalorder %v14, %v127
    %v129 = vsel %vm128, -1e+30, %v124
    %vm130 = vcmask 27648
    %v131 = vsel %vm130, %v129, -inf
    %132 = vmax.xlane.f32.xlu0 %v131
    %v133 = vpop.xlane.xlu0 %132
    %v134 = vsub.f32 %v129, %v133
    %v135 = vmul.f32 %v134, 1.442695
    %v136 = vpow.pop %v135
    %137 = vrot.lane.b32.xlu0 %v96, 96
    %v138 = vpop.permute.xlu0 %137
    %vm139 = vcmask 31744
    %v141 = vsel %vm139, %v136, 0
    %vm143 = vcmask 1043456
    %v144 = vsel %vm143, %v138, 0
    %146 = vmatpush.msra.mxu0 0.0
    %147 = vmatpush.msra.mxu0 0.0
    %148 = vmatpush.msra.mxu0 0.0
    %149 = vmatpush.msra.mxu0 0.0
    %150 = vmatpush.msra.mxu0 0.0
    %151 = vmatpush.msra.mxu0 0.0
    %152 = vmatpush.msra.mxu0 0.0
    %153 = vmatpush.msra.mxu0 0.0
    %154 = vmatpush.msra.mxu0 0.0
    %155 = vmatpush.msra.mxu0 0.0
    %156 = vmatpush.msra.mxu0 0.0
    %157 = vmatpush.msra.mxu0 0.0
    %158 = vmatpush.msra.mxu0 0.0
    %159 = vmatpush.msra.mxu0 0.0
    %160 = vmatpush.msra.mxu0 0.0
    %161 = vmatpush.msra.mxu0 %v144
    %162 = vmatmul.f32.gmra.mxu0 %v141
    %v163 = vpop.f32.mrf.mxu0
    %v164 = vadd.f32 0.0, %v163
    %165 = vdwg.mxu0
    %v166 = vsel %vm130, %v136, 0.0
    %167 = vadd.xlane.f32.xlu0 %v166
    %v168 = vpop.xlane.xlu0 %167
    %v169 = vrcp.pop %v168
    %v170 = vmul.f32 %v168, %v169
    %v171 = vsub.f32 1.0, %v170
    %v172 = vmul.f32 %v169, %v171
    %v173 = vadd.f32 %v169, %v172
    %vm174 = vweird.f32 %v168
    %vm175 = vweird.f32 %v169
    %vm176 = vmor %vm174, %vm175
    %v177 = vsel %vm176, %v169, %v173
    %v178 = vand.u32 2147483647, %v168
    %vm179 = vcmp.eq.f32.partialorder %v178, 8.507059e+37
    %v180 = vand.u32 %v168, 2147483648
    %v181 = vor.u32 1.1754944e-38, %v180
    %v182 = vsel %vm179, %v181, %v177
    %v183 = vmul.f32 %v164, %v182
    %v184 = vld [vmem:[%s1 + $0x88] sm:$0xff]
    %v185 = vld [vmem:[%s1 + $0x90] sm:$0x7f]
    %v186 = vld [vmem:[%s1 + $0x98] sm:$0xff]
    %v187 = vld [vmem:[%s1 + $0xa0] sm:$0x3f]
    %v189 = vsel %vm101, %v183, 0
    %vm191 = vcmask 1045504
    %v193 = vsel %vm191, %v187, 0
    %195 = vmatpush.msra.mxu0 0.0
    %196 = vmatpush.msra.mxu0 0.0
    %197 = vmatpush.msra.mxu0 0.0
    %198 = vmatpush.msra.mxu0 0.0
    %199 = vmatpush.msra.mxu0 0.0
    %200 = vmatpush.msra.mxu0 0.0
    %201 = vmatpush.msra.mxu0 0.0
    %202 = vmatpush.msra.mxu0 0.0
    %203 = vmatpush.msra.mxu0 0.0
    %204 = vmatpush.msra.mxu0 0.0
    %205 = vmatpush.msra.mxu0 0.0
    %206 = vmatpush.msra.mxu0 0.0
    %207 = vmatpush.msra.mxu0 0.0
    %208 = vmatpush.msra.mxu0 0.0
    %209 = vmatpush.msra.mxu0 %v193
    %210 = vmatpush.msra.mxu0 %v186
    %211 = vmatmul.f32.gmra.mxu0 %v189
    %v212 = vpop.f32.mrf.mxu0
    %v213 = vadd.f32 0.0, %v212
    %214 = vdwg.mxu0
    %v216 = vsel %vm74, %v185, 0
    %218 = vmatpush.msra.mxu0 0.0
    %219 = vmatpush.msra.mxu0 0.0
    %220 = vmatpush.msra.mxu0 0.0
    %221 = vmatpush.msra.mxu0 0.0
    %222 = vmatpush.msra.mxu0 0.0
    %223 = vmatpush.msra.mxu0 0.0
    %224 = vmatpush.msra.mxu0 0.0
    %225 = vmatpush.msra.mxu0 0.0
    %226 = vmatpush.msra.mxu0 0.0
    %227 = vmatpush.msra.mxu0 0.0
    %228 = vmatpush.msra.mxu0 0.0
    %229 = vmatpush.msra.mxu0 0.0
    %230 = vmatpush.msra.mxu0 0.0
    %231 = vmatpush.msra.mxu0 0.0
    %232 = vmatpush.msra.mxu0 %v216
    %233 = vmatpush.msra.mxu0 %v184
    %234 = vmatmul.f32.gmra.mxu0 %v72
    %v235 = vpop.f32.mrf.mxu0
    %v236 = vadd.f32 %v213, %v235
    %237 = vdwg.mxu0
    %v238 = vmax.f32 %v236, 0.0
    %v239 = vld [vmem:[%s1 + $0xa8] sm:$0xff]
    %vm240 = vcmask 64512
    %v242 = vsel %vm240, %v238, 0
    %244 = vmatpush.msra.mxu0 0.0
    %245 = vmatpush.msra.mxu0 0.0
    %246 = vmatpush.msra.mxu0 0.0
    %247 = vmatpush.msra.mxu0 0.0
    %248 = vmatpush.msra.mxu0 0.0
    %249 = vmatpush.msra.mxu0 0.0
    %250 = vmatpush.msra.mxu0 0.0
    %251 = vmatpush.msra.mxu0 0.0
    %252 = vmatpush.msra.mxu0 0.0
    %253 = vmatpush.msra.mxu0 0.0
    %254 = vmatpush.msra.mxu0 0.0
    %255 = vmatpush.msra.mxu0 0.0
    %256 = vmatpush.msra.mxu0 0.0
    %257 = vmatpush.msra.mxu0 0.0
    %258 = vmatpush.msra.mxu0 0.0
    %259 = vmatpush.msra.mxu0 %v239
    %260 = vmatmul.f32.gmra.mxu0 %v242
    %v261 = vpop.f32.mrf.mxu0
    %v262 = vadd.f32 0.0, %v261
    %263 = vdwg.mxu0
    %265 = vrot.lane.b32.xlu0 %v262, 16
    %v266 = vpop.permute.xlu0 %265
    %v268 = vadd.f32 %v236, %v266
    %270 = vrot.lane.b32.xlu0 %v268, 112
    %v271 = vpop.permute.xlu0 %270
    %273 = vst.msk [vmem:[#allocation2] sm:$0xf] %vm130, %v271
    // Predicated region
    $region10: #{forward.1} parent=1 // pred_check
      _
    $region11: #{forward.1} parent=1 // pred_check_branch
      %275 = sbr.rel (0) target = $region13
    $region12: #{forward.1} parent=1 // pred_region
      %277 = vsyncadd [#allocation3], 0
      %s279 = sshll.u32 [#allocation2], 4
      %s280 = int_to_ptr.vmem [resolvable:$true] %s279
      %s281 = sshll.u32 %s2, 4
      %s282 = int_to_ptr.hbm [resolvable:$true] %s281
      %284 = dma.vmem_to_hbm [thread:$0]  %s280, 64, %s282, [#allocation3]
    $region13: #{forward.1} parent=1 // pred_fallthru
      _
    // Predicated region
    $region14: #{forward.1} parent=1 // pred_check
      _
    $region15: #{forward.1} parent=1 // pred_check_branch
      %286 = sbr.rel (0) target = $region17
    $region16: #{forward.1} parent=1 // pred_region
      %288 = dma.done [#allocation3], 64
    $region17: #{forward.1} parent=1 // pred_fallthru
      _
    %289 = vsyncpa [#allocation3], 1

</llo_original>
